<compile_context>
chip_gen: v7x
topology: tpu7x:2x2x1
jax: 0.10.0
libtpu: 0.0.40
codegen_flags: <defaults>
</compile_context>

<pallas_src>
import jax
import jax.numpy as jnp
from jax import lax
from jax.experimental import pallas as pl
from jax.experimental.pallas import tpu as pltpu

_LANES = 128
_SUBLANES = 8


def _round_up(x, m):
    return ((x + m - 1) // m) * m


def _nll_partial_kernel(pred_ref, target_ref, partial_ref):
    """Per-tile partial sum of pred[r, target[r]] (no normalization/negation).

    pred_ref:    (TN, C)     log-probabilities (f32 or bf16) in VMEM
    target_ref:  (TN, 1)     int32 class ids in VMEM; padded tail rows hold -1
    partial_ref: (1, 8, 128) f32 lane-dense slab holding the broadcast partial
    """
    pred = pred_ref[...]
    tgt = target_ref[...]
    tn, c = pred.shape

    # One-hot gather of pred[r, target[r]].  Padded tail rows carry target -1,
    # which matches no class, so no per-element row-validity mask is needed
    # (saves ~3 VALU ops + a sublane iota per pred vreg on every tile).
    class_ids = lax.broadcasted_iota(jnp.int32, (tn, c), 1)           # (TN, C)
    mask = class_ids == tgt

    # Select (NOT multiply) so unspecified values in ragged-tail pred rows
    # (possibly NaN/Inf) can never leak into the sum.
    picked = jnp.where(mask, pred, jnp.zeros_like(pred))              # input dtype

    # Class-axis reduction stays in the input dtype: each row has at most one
    # nonzero, so it is exact even in bf16 (keeps the bf16 VPU path on
    # v6e/v7x).  Cross-row accumulation happens in f32.
    row_vals = jnp.sum(picked, axis=-1, keepdims=True)                # (TN, 1)
    partial = jnp.sum(row_vals.astype(jnp.float32))

    # Lane-dense (1, 8, 128) writeback -> unmasked vst, satisfies (8,128) rule.
    partial_ref[...] = jnp.full(partial_ref.shape, partial, dtype=jnp.float32)


def _vmem_capacity_bytes():
    """Physical VMEM of the current TPU generation (fallback: v7x's 64 MiB)."""
    try:
        return int(pltpu.get_tpu_info().vmem_capacity_bytes)
    except Exception:
        return 64 * 1024 * 1024


def _stream_budget_and_limit():
    cap = _vmem_capacity_bytes()
    # Total bytes allowed for the double-buffered pred + target stream buffers.
    #   v5e/v6e (128 MiB) -> 20 MiB of stream buffers (pred buffers ~8-10 MiB)
    #   v7x     (64  MiB) -> ~20 MiB, still well under the per-core scoped limit
    budget = min(cap // 3, 20 * 1024 * 1024)
    # Scoped-VMEM limit handed to Mosaic; v5e's 16 MiB default would OOM.
    limit = min(cap // 2, 48 * 1024 * 1024)
    return budget, limit


def _pick_block_rows(n, c, itemsize, requested, budget):
    """Row-tile size: largest multiple of 8 whose streams fit the byte budget."""
    if requested is not None:
        tn = min(int(requested), n)
    else:
        c_pad = _round_up(c, _LANES)
        # Double-buffered footprint per row:
        #   2 pred buffers   : c_pad * itemsize bytes each
        #   2 target buffers : (TN,1) int32 lane-pads to 128 lanes -> 512 B each
        bytes_per_row = 2 * (c_pad * itemsize) + 2 * (_LANES * 4)
        tn = max(_SUBLANES, budget // bytes_per_row)
        # Give v7x's second TensorCore work: aim for >= 4 tiles as long as the
        # tiles stay >= 1024 rows (per-step overhead still well amortized).
        quarter = _round_up(pl.cdiv(n, 4), _SUBLANES)
        if quarter >= 1024:
            tn = min(tn, quarter)
    if tn >= n:
        return n                                       # block == full dim, always legal
    return max(_SUBLANES, (tn // _SUBLANES) * _SUBLANES)  # multiple of 8


def nll_loss_pallas(pred, target, block_rows=None):
    """-mean_i pred[i, target[i]]  (F.nll_loss, mean reduction, no weights).

    pred: (N, C) log-probabilities (f32 or bf16); target: (N,) integer class ids.
    """
    n, c = pred.shape
    budget, vmem_limit = _stream_budget_and_limit()
    tn = _pick_block_rows(n, c, pred.dtype.itemsize, block_rows, budget)
    num_tiles = pl.cdiv(n, tn)
    n_pad = num_tiles * tn

    # Pad targets host-side with the invalid class -1 so ragged-tail pred rows
    # are rejected by the one-hot compare itself (no in-kernel row mask).
    tgt = target.astype(jnp.int32).reshape(n)
    if n_pad != n:
        tgt = jnp.concatenate([tgt, jnp.full((n_pad - n,), -1, jnp.int32)])
    target2d = tgt.reshape(n_pad, 1)   # contiguous HBM source for (TN, 1) blocks

    partials = pl.pallas_call(
        _nll_partial_kernel,
        out_shape=jax.ShapeDtypeStruct((num_tiles, _SUBLANES, _LANES), jnp.float32),
        grid_spec=pltpu.PrefetchScalarGridSpec(
            num_scalar_prefetch=0,
            grid=(num_tiles,),
            in_specs=[
                pl.BlockSpec((tn, c), lambda i: (i, 0)),
                pl.BlockSpec((tn, 1), lambda i: (i, 0)),
            ],
            out_specs=pl.BlockSpec((1, _SUBLANES, _LANES), lambda i: (i, 0, 0)),
        ),
        compiler_params=pltpu.CompilerParams(
            # Independent per-tile partials -> row range can be split across
            # TensorCores (matters on v7x; harmless on v5e/v6e).
            dimension_semantics=("parallel",),
            vmem_limit_bytes=int(vmem_limit),
        ),
    )(pred, target2d)

    per_tile = partials[:, 0, 0]                        # (num_tiles,)
    return (-jnp.sum(per_tile)) * jnp.float32(1.0 / n)  # divisor is the true N


def get_loss(pred, target, trans_feat=None):
    """Mirror of the PyTorch get_loss.forward: returns F.nll_loss(pred, target).

    trans_feat is accepted for signature parity but (as in the reference
    module) does not contribute to the loss.
    """
    return nll_loss_pallas(pred, target)


if __name__ == "__main__":
    key = jax.random.PRNGKey(0)
    k1, k2, k3, k4 = jax.random.split(key, 4)

    # Case 1: typical small cls-head shapes, single-tile path (default tiling).
    N, C = 8, 16
    logits = jax.random.normal(k1, (N, C), dtype=jnp.float32)
    pred = jax.nn.log_softmax(logits, axis=-1)
    target = jax.random.randint(k2, (N,), 0, C, dtype=jnp.int32)
    trans_feat = jax.random.normal(k3, (N, 3, 3), dtype=jnp.float32)  # unused, parity only

    loss = jax.block_until_ready(get_loss(pred, target, trans_feat))
    ref = -jnp.mean(pred[jnp.arange(N), target])
    assert jnp.allclose(loss, ref, atol=1e-6, rtol=1e-6), (loss, ref)

    # Case 2: multi-tile path with a ragged tail (N=20, 8-row tiles -> 3 tiles,
    # 4 padded rows neutralized via target=-1; divisor stays the true N).
    N2, C2 = 20, 16
    logits2 = jax.random.normal(k4, (N2, C2), dtype=jnp.float32)
    pred2 = jax.nn.log_softmax(logits2, axis=-1)
    target2 = jax.random.randint(k2, (N2,), 0, C2, dtype=jnp.int32)
    loss2 = jax.block_until_ready(nll_loss_pallas(pred2, target2, block_rows=8))
    ref2 = -jnp.mean(pred2[jnp.arange(N2), target2])
    assert jnp.allclose(loss2, ref2, atol=1e-6, rtol=1e-6), (loss2, ref2)

    # Case 3: bf16 log-probs (half the HBM traffic), bf16 in-row reduce + f32
    # cross-row accumulation.
    pred3 = pred2.astype(jnp.bfloat16)
    loss3 = jax.block_until_ready(nll_loss_pallas(pred3, target2, block_rows=8))
    ref3 = -jnp.mean(pred3.astype(jnp.float32)[jnp.arange(N2), target2])
    assert jnp.allclose(loss3, ref3, atol=1e-5, rtol=1e-5), (loss3, ref3)

    # Case 4: ModelNet40-like head (C=40) with the default budget-based tiling.
    N4, C4 = 512, 40
    logits4 = jax.random.normal(k3, (N4, C4), dtype=jnp.float32)
    pred4 = jax.nn.log_softmax(logits4, axis=-1)
    target4 = jax.random.randint(k4, (N4,), 0, C4, dtype=jnp.int32)
    loss4 = jax.block_until_ready(get_loss(pred4, target4, None))
    ref4 = -jnp.mean(pred4[jnp.arange(N4), target4])
    assert jnp.allclose(loss4, ref4, atol=1e-6, rtol=1e-6), (loss4, ref4)

    print("KERNEL_OK")
</pallas_src>

<mosaic_0001>
module attributes {stable_mosaic.version = 11 : i64} {
  func.func @_nll_partial_kernel(%arg0: i32, %arg1: memref<8x16xf32, #tpu.memory_space<vmem>>, %arg2: memref<8x1xi32, #tpu.memory_space<vmem>>, %arg3: memref<1x8x128xf32, #tpu.memory_space<vmem>>) attributes {dimension_semantics = [#tpu.dimension_semantics<parallel>], iteration_bounds = array<i64: 1>, scalar_prefetch = 0 : i64, scratch_operands = 0 : i64, tpu.core_type = #tpu.core_type<tc>, window_params = [{transform_indices = @transform_0, window_bounds = array<i64: 8, 16>}, {transform_indices = @transform_1, window_bounds = array<i64: 8, 1>}, {transform_indices = @transform_2, window_bounds = array<i64: 1, 8, 128>}]} {
    %c0 = arith.constant 0 : index
    %c0_0 = arith.constant 0 : index
    %0 = vector.load %arg1[%c0, %c0_0] : memref<8x16xf32, #tpu.memory_space<vmem>>, vector<8x16xf32>
    %c0_1 = arith.constant 0 : index
    %c0_2 = arith.constant 0 : index
    %1 = vector.load %arg2[%c0_1, %c0_2] : memref<8x1xi32, #tpu.memory_space<vmem>>, vector<8x1xi32>
    %2 = tpu.iota {dimensions = array<i32: 1>} : vector<8x16xi32>
    %3 = vector.broadcast %1 : vector<8x1xi32> to vector<8x16xi32>
    %4 = arith.cmpi eq, %2, %3 : vector<8x16xi32>
    %cst = arith.constant 0.000000e+00 : f32
    %5 = vector.broadcast %cst : f32 to vector<8x16xf32>
    %6 = arith.select %4, %0, %5 : vector<8x16xi1>, vector<8x16xf32>
    %cst_3 = arith.constant dense<0.000000e+00> : vector<8xf32>
    %7 = vector.multi_reduction <add>, %6, %cst_3 [1] : vector<8x16xf32> to vector<8xf32>
    %8 = vector.shape_cast %7 : vector<8xf32> to vector<8x1xf32>
    %9 = vector.shape_cast %8 : vector<8x1xf32> to vector<1x8x1xf32>
    %cst_4 = arith.constant dense<0.000000e+00> : vector<1xf32>
    %10 = vector.multi_reduction <add>, %9, %cst_4 [1, 2] : vector<1x8x1xf32> to vector<1xf32>
    %11 = vector.shape_cast %10 : vector<1xf32> to vector<1x1x1xf32>
    %12 = vector.extract %11[0, 0, 0] : f32 from vector<1x1x1xf32>
    %13 = vector.broadcast %12 : f32 to vector<1x8x128xf32>
    %c0_5 = arith.constant 0 : index
    %c0_6 = arith.constant 0 : index
    %c0_7 = arith.constant 0 : index
    %14 = vector.load %arg3[%c0_5, %c0_6, %c0_7] : memref<1x8x128xf32, #tpu.memory_space<vmem>>, vector<1x8x128xf32>
    tpu.vector_store %arg3[%c0_5, %c0_6, %c0_7], %13 {strides = array<i32>} : memref<1x8x128xf32, #tpu.memory_space<vmem>>, vector<1x8x128xf32>,
    return
  }
  func.func @transform_0(%arg0: i32) -> (i32, i32) {
    %c0_i32 = arith.constant 0 : i32
    %c0_i32_0 = arith.constant 0 : i32
    return %arg0, %c0_i32 : i32, i32
  }
  func.func @transform_1(%arg0: i32) -> (i32, i32) {
    %c0_i32 = arith.constant 0 : i32
    %c0_i32_0 = arith.constant 0 : i32
    return %arg0, %c0_i32 : i32, i32
  }
  func.func @transform_2(%arg0: i32) -> (i32, i32, i32) {
    %c0_i32 = arith.constant 0 : i32
    %c0_i32_0 = arith.constant 0 : i32
    %c0_i32_1 = arith.constant 0 : i32
    return %arg0, %c0_i32, %c0_i32_0 : i32, i32, i32
  }
}

</mosaic_0001>

<llo_original>
// kernel: tpu_custom_call.1
$region0: #{tpu_custom_call.1}
  #allocation0 [shape = 'u32[]', space=smem, size = 0x4, offset = 0x4, fixed_abs, tag = 'smem constant byte address 0x4 - core index']
  #allocation1 [shape = 'u32[144,128]{1,0:T(1,128)}', space=vmem, size = 0x12000, scoped, tag = 'internal scratch']
  %s0 = inlined_call_operand.vmem [shape: f32[8,16], index: 0, kind: input, shape index: {}]
  %s1 = inlined_call_operand.vmem [shape: s32[8,1], index: 1, kind: input, shape index: {}]
  %s2 = inlined_call_operand.hbm [shape: f32[1,8,128], index: 2, kind: output, shape index: {}]
  %s3 = sld [smem:[#allocation0]]
  $region18: #{tpu_custom_call.1} parent=0
    _
  %s5 = ssub.s32 1, %s3
  %s6 = scalar_select 0, %s5, %s3
  $region1: #{tpu_custom_call.1} parent=0
    #allocation2 [shape = 'u8[4096]{0}', space=vmem, size = 0x1000, scoped, tag = 'output window, operand 0, single buffered']
    #allocation3 [shape = 's32[1]{0}', space=sflag, size = 0x4, scoped, tag = 'scoped memory for tpu_custom_call.1']
    %7 = vsyncpa [#allocation3], 0
    // Predicated region
    $region2: #{tpu_custom_call.1} parent=1 // pred_check
      _
    $region3: #{tpu_custom_call.1} parent=1 // pred_check_branch
      %9 = sbr.rel (0) target = $region5
    $region4: #{tpu_custom_call.1} parent=1 // pred_region
      _
    $region5: #{tpu_custom_call.1} parent=1 // pred_fallthru
      _
    // Predicated region
    $region6: #{tpu_custom_call.1} parent=1 // pred_check
      _
    $region7: #{tpu_custom_call.1} parent=1 // pred_check_branch
      %11 = sbr.rel (0) target = $region9
    $region8: #{tpu_custom_call.1} parent=1 // pred_region
      _
    $region9: #{tpu_custom_call.1} parent=1 // pred_fallthru
      _
    %v12 = vld [vmem:[%s0] sm:$0xff]
    %v13 = vld [vmem:[%s1] sm:$0xff]
    %v14 = vlaneseq
    %v15 = vand.u32 %v14, 127
    %16 = vset.pattern.permute.xlu0 0
    %17 = vperm.xlu0 %16, %v13
    %v18 = vpop.permute.xlu0 %17
    %vm19 = vcmp.eq.s32.totalorder %v15, %v18
    %v20 = vsel %vm19, %v12, 0.0
    %vm21 = vcmask 130048
    %v22 = vsel %vm21, %v20, 0.0
    %23 = vadd.xlane.f32.xlu0 %v22
    %v24 = vpop.xlane.xlu0 %23
    %vm25 = vcmask 7168
    %v26 = vsel %vm25, %v24, 0.0
    %27 = vadd.xlane.f32.xlu0 %v26
    %v28 = vpop.xlane.xlu0 %27
    %v29 = vrot.slane %v28, 4
    %v30 = vadd.f32 %v28, %v29
    %v31 = vrot.slane %v30, 2
    %v32 = vadd.f32 %v30, %v31
    %v33 = vrot.slane %v32, 1
    %v34 = vadd.f32 %v32, %v33
    %s35 = vtos %v34
    %v36 = vstv %s35
    %37 = vst [vmem:[#allocation2] sm:$0xff] %v36
    // Predicated region
    $region10: #{tpu_custom_call.1} parent=1 // pred_check
      _
    $region11: #{tpu_custom_call.1} parent=1 // pred_check_branch
      %39 = sbr.rel (0) target = $region13
    $region12: #{tpu_custom_call.1} parent=1 // pred_region
      %s41 = ssub.s32 128, 128
      %42 = vsyncadd [#allocation3], %s41
      %s44 = sshll.u32 [#allocation2], 4
      %s45 = int_to_ptr.vmem [resolvable:$true] %s44
      %47 = dma.vmem_to_hbm [thread:$0]  %s45, 128, %s2, [#allocation3]
    $region13: #{tpu_custom_call.1} parent=1 // pred_fallthru
      _
    // Predicated region
    $region14: #{tpu_custom_call.1} parent=1 // pred_check
      _
    $region15: #{tpu_custom_call.1} parent=1 // pred_check_branch
      %49 = sbr.rel (0) target = $region17
    $region16: #{tpu_custom_call.1} parent=1 // pred_region
      %50 = dma.done [#allocation3], 128
    $region17: #{tpu_custom_call.1} parent=1 // pred_fallthru
      _
    %51 = vsyncpa [#allocation3], 1

</llo_original>
